<compile_context>
chip_gen: v6e
topology: v6e:2x2x1
jax: 0.10.0
libtpu: 0.0.40
codegen_flags: <defaults>
</compile_context>

<pallas_src>
import math

import jax
import jax.numpy as jnp
from jax.experimental import pallas as pl
from jax.experimental.pallas import tpu as pltpu

# ----------------------------- problem sizes --------------------------------
B = 2          # batch
S = 8          # key/value sequence length
H = 32         # att_hidden_size
NH = 8         # num_heads (fixed by the module)
HD = H // NH   # head dim

assert 3 * H <= 128, "fused block-diag contraction must stay <= 128 lanes (v5e MXU)"

# ------------------- packed-constant slab layout (rows, lane 0) -------------
_align8 = lambda n: (n + 7) // 8 * 8

ROW_WBLK  = 0                          # (3H, 3H) block-diag fused projection weight
ROW_BBLK  = 3 * H                      # (1, 3H)  fused projection bias
ROW_WO    = _align8(ROW_BBLK + 1)      # (H, H)   out-proj weight (transposed)
ROW_BO    = ROW_WO + H                 # (1, H)   out-proj bias
ROW_MASK  = _align8(ROW_BO + 1)        # (H, NH)  hidden-dim -> head one-hot
ROW_MASKT = ROW_MASK + H               # (NH, H)  head -> hidden-dim one-hot
ROW_SEG   = ROW_MASKT + NH             # (B, B*S) batch-segment one-hot
PARAM_ROWS = _align8(ROW_SEG + B)      # 192 rows total -> (192, 128) f32 slab


# ------------------------------- kernel -------------------------------------
def cross_attention_kernel(x_ref, p_ref, o_ref):
    x = x_ref[...]                                            # (B*S, 3H) = [q_rep | k | v]

    # Static sub-views of the packed constant slab (all start at lane 0 and a
    # sublane-aligned row: masked loads only, no lane shifts).
    w_blk = p_ref[ROW_WBLK:ROW_WBLK + 3 * H, 0:3 * H]         # (96, 96)
    b_blk = p_ref[ROW_BBLK:ROW_BBLK + 1, 0:3 * H]             # (1, 96)
    wo_t  = p_ref[ROW_WO:ROW_WO + H, 0:H]                     # (32, 32)
    bo    = p_ref[ROW_BO:ROW_BO + 1, 0:H]                     # (1, 32)
    mask  = p_ref[ROW_MASK:ROW_MASK + H, 0:NH]                # (32, 8)
    maskt = p_ref[ROW_MASKT:ROW_MASKT + NH, 0:H]              # (8, 32)
    seg   = p_ref[ROW_SEG:ROW_SEG + B, 0:B * S]               # (2, 16)

    # One fused projection matmul (block-diagonal weights).  The q path
    # already carries the 1/sqrt(HD) attention scale (folded at init).
    proj = jnp.dot(x, w_blk, preferred_element_type=jnp.float32) + b_blk
    q2 = proj[:, 0:H]                                         # (B*S, H), scaled
    k2 = proj[:, H:2 * H]                                     # (B*S, H)
    v2 = proj[:, 2 * H:3 * H]                                 # (B*S, H)

    # Per-head scores for all (batch, key) rows at once:
    # scores[b*S+s, n] = sum_{d in head n} q2[b,d] * k2[b,s,d]
    scores = jnp.dot(k2 * q2, mask, preferred_element_type=jnp.float32)       # (B*S, NH)

    # Softmax numerator with a PER-SEGMENT max stabilizer (static sublane
    # slices + XLU max + EUP exp; off the MXU critical path).
    e_parts = []
    for b in range(B):
        sb = scores[b * S:(b + 1) * S]                                        # (S, NH)
        e_parts.append(jnp.exp(sb - jnp.max(sb, axis=0, keepdims=True)))
    e = jnp.concatenate(e_parts, axis=0)                                      # (B*S, NH)

    # Broadcast per-head probs over that head's hidden dims, then reduce both
    # the context numerator and the softmax denominator for every batch
    # segment with ONE matmul against the (B, B*S) segment one-hot.
    e_full = jnp.dot(e, maskt, preferred_element_type=jnp.float32)            # (B*S, H)
    cat = jnp.concatenate([e_full * v2, e_full], axis=-1)                     # (B*S, 2H)
    red = jnp.dot(seg, cat, preferred_element_type=jnp.float32)               # (B, 2H)
    ctx_un = red[:, 0:H]
    denom = red[:, H:2 * H]

    # Softmax normalization folded into the context scale.  approx reciprocal
    # runs on the otherwise-idle EUP; one Newton step restores ~f32 accuracy.
    r = pl.reciprocal(denom, approx=True)
    r = r * (2.0 - denom * r)
    ctx = ctx_un * r                                                          # (B, H)

    # MHA out-projection, single store of the whole output tile.
    out = jnp.dot(ctx, wo_t, preferred_element_type=jnp.float32) + bo
    o_ref[...] = out.astype(o_ref.dtype)


# ------------------------------- wrapper -------------------------------------
def cross_attention(query, key, value, params):
    b, h = query.shape
    _, s, _ = key.shape
    # Free HLO plumbing: repeat the (single) query row per key position and
    # concatenate [q_rep | k | v] so the kernel does one fused projection.
    q_rep = jnp.repeat(query, s, axis=0)                 # (B*S, H)
    kf = key.reshape(b * s, h)                           # (B*S, H)
    vf = value.reshape(b * s, h)                         # (B*S, H)
    x = jnp.concatenate([q_rep, kf, vf], axis=-1)        # (B*S, 3H)

    vmem = lambda: pl.BlockSpec(memory_space=pltpu.MemorySpace.VMEM)
    return pl.pallas_call(
        cross_attention_kernel,
        out_shape=jax.ShapeDtypeStruct((b, h), jnp.float32),
        in_specs=[vmem(), vmem()],
        out_specs=vmem(),
    )(x, params)


# ------------------------- deterministic parameters ---------------------------
def init_raw_params(key):
    """PyTorch-layout parameters: Linear weights are (out, in)."""
    ks = jax.random.split(key, 10)
    bound = 1.0 / math.sqrt(H)
    u = lambda k, shape: jax.random.uniform(k, shape, jnp.float32, -bound, bound)
    wq = u(ks[0], (H, H));  bq = u(ks[1], (H,))
    wk = u(ks[2], (H, H));  bk = u(ks[3], (H,))
    wv = u(ks[4], (H, H));  bv = u(ks[5], (H,))
    in_proj_w = u(ks[6], (3 * H, H))     # MHA in_proj_weight
    in_proj_b = u(ks[7], (3 * H,))       # MHA in_proj_bias
    wo = u(ks[8], (H, H))                # MHA out_proj.weight
    bo = u(ks[9], (H,))                  # MHA out_proj.bias
    return (wq, bq, wk, bk, wv, bv, in_proj_w, in_proj_b, wo, bo)


def fuse_params(raw):
    """Fold back-to-back linears + the attention scale, and pack every
    constant into one (PARAM_ROWS, 128) f32 slab (single input DMA)."""
    (wq, bq, wk, bk, wv, bv, wi, bi, wo, bo) = raw
    hp = jax.lax.Precision.HIGHEST
    mm = lambda a, b: jnp.dot(a, b, precision=hp)

    wiq, wik, wiv = wi[0:H], wi[H:2 * H], wi[2 * H:3 * H]
    biq, bik, biv = bi[0:H], bi[H:2 * H], bi[2 * H:3 * H]
    scale = 1.0 / math.sqrt(HD)

    # y = (x @ Wa^T + ba) @ Wb^T + bb  ==  x @ (Wa^T @ Wb^T) + (ba @ Wb^T + bb)
    aq = mm(wq.T, wiq.T) * scale
    cq = (mm(bq, wiq.T) + biq) * scale       # scale folded into the q path
    ak = mm(wk.T, wik.T)
    ck = mm(bk, wik.T) + bik
    av = mm(wv.T, wiv.T)
    cv = mm(bv, wiv.T) + biv

    w_blk = jnp.zeros((3 * H, 3 * H), jnp.float32)
    w_blk = w_blk.at[0:H, 0:H].set(aq)
    w_blk = w_blk.at[H:2 * H, H:2 * H].set(ak)
    w_blk = w_blk.at[2 * H:3 * H, 2 * H:3 * H].set(av)
    b_blk = jnp.concatenate([cq, ck, cv])                                    # (3H,)

    head_id = jnp.arange(H) // HD
    mask = (head_id[:, None] == jnp.arange(NH)[None, :]).astype(jnp.float32)  # (H, NH)
    maskt = mask.T                                                             # (NH, H)
    batch_id = jnp.arange(B * S) // S
    seg = (batch_id[None, :] == jnp.arange(B)[:, None]).astype(jnp.float32)   # (B, B*S)

    P = jnp.zeros((PARAM_ROWS, 128), jnp.float32)
    P = P.at[ROW_WBLK:ROW_WBLK + 3 * H, 0:3 * H].set(w_blk)
    P = P.at[ROW_BBLK, 0:3 * H].set(b_blk)
    P = P.at[ROW_WO:ROW_WO + H, 0:H].set(wo.T)
    P = P.at[ROW_BO, 0:H].set(bo)
    P = P.at[ROW_MASK:ROW_MASK + H, 0:NH].set(mask)
    P = P.at[ROW_MASKT:ROW_MASKT + NH, 0:H].set(maskt)
    P = P.at[ROW_SEG:ROW_SEG + B, 0:B * S].set(seg)
    return P


# ------------------------------ pure-JAX reference ----------------------------
def reference(query, key, value, raw):
    """Mirrors the PyTorch module with the UNFUSED parameters (f32 precision)."""
    (wq, bq, wk, bk, wv, bv, wi, bi, wo, bo) = raw
    hp = jax.lax.Precision.HIGHEST
    qp = jnp.dot(query, wq.T, precision=hp) + bq
    kp = jnp.dot(key, wk.T, precision=hp) + bk
    vp = jnp.dot(value, wv.T, precision=hp) + bv
    q2 = jnp.dot(qp, wi[0:H].T, precision=hp) + bi[0:H]
    k2 = jnp.dot(kp, wi[H:2 * H].T, precision=hp) + bi[H:2 * H]
    v2 = jnp.dot(vp, wi[2 * H:3 * H].T, precision=hp) + bi[2 * H:3 * H]
    q2h = q2.reshape(B, NH, HD)
    k2h = k2.reshape(B, S, NH, HD)
    v2h = v2.reshape(B, S, NH, HD)
    scores = jnp.einsum('bnd,bsnd->bns', q2h, k2h, precision=hp) / math.sqrt(HD)
    p = jax.nn.softmax(scores, axis=-1)
    ctx = jnp.einsum('bns,bsnd->bnd', p, v2h, precision=hp).reshape(B, H)
    return jnp.dot(ctx, wo.T, precision=hp) + bo


# ---------------------------------- main --------------------------------------
if __name__ == "__main__":
    key0 = jax.random.PRNGKey(0)
    kq, kk, kv, kp = jax.random.split(key0, 4)

    query = jax.random.normal(kq, (B, H), jnp.float32)
    key_in = jax.random.normal(kk, (B, S, H), jnp.float32)
    value = jax.random.normal(kv, (B, S, H), jnp.float32)

    raw = init_raw_params(kp)
    params = fuse_params(raw)

    out = jax.block_until_ready(cross_attention(query, key_in, value, params))
    ref = reference(query, key_in, value, raw)

    assert out.shape == (B, H)
    max_err = float(jnp.max(jnp.abs(out - ref)))
    assert jnp.allclose(out, ref, rtol=1e-4, atol=1e-4), f"max abs err {max_err}"

    print("KERNEL_OK")
</pallas_src>

<mosaic_0001>
module attributes {stable_mosaic.version = 11 : i64} {
  func.func @cross_attention_kernel(%arg0: memref<16x96xf32, #tpu.memory_space<vmem>>, %arg1: memref<192x128xf32, #tpu.memory_space<vmem>>, %arg2: memref<2x32xf32, #tpu.memory_space<vmem>>) attributes {dimension_semantics = [], scalar_prefetch = 0 : i64, scratch_operands = 0 : i64, tpu.core_type = #tpu.core_type<tc>} {
    %c0 = arith.constant 0 : index
    %c0_0 = arith.constant 0 : index
    %0 = vector.load %arg0[%c0, %c0_0] : memref<16x96xf32, #tpu.memory_space<vmem>>, vector<16x96xf32>
    %c0_1 = arith.constant 0 : index
    %c0_2 = arith.constant 0 : index
    %1 = vector.load %arg1[%c0_1, %c0_2] : memref<192x128xf32, #tpu.memory_space<vmem>>, vector<96x96xf32>
    %c96 = arith.constant 96 : index
    %c0_3 = arith.constant 0 : index
    %2 = vector.load %arg1[%c96, %c0_3] : memref<192x128xf32, #tpu.memory_space<vmem>>, vector<1x96xf32>
    %c104 = arith.constant 104 : index
    %c0_4 = arith.constant 0 : index
    %3 = vector.load %arg1[%c104, %c0_4] : memref<192x128xf32, #tpu.memory_space<vmem>>, vector<32x32xf32>
    %c136 = arith.constant 136 : index
    %c0_5 = arith.constant 0 : index
    %4 = vector.load %arg1[%c136, %c0_5] : memref<192x128xf32, #tpu.memory_space<vmem>>, vector<1x32xf32>
    %c144 = arith.constant 144 : index
    %c0_6 = arith.constant 0 : index
    %5 = vector.load %arg1[%c144, %c0_6] : memref<192x128xf32, #tpu.memory_space<vmem>>, vector<32x8xf32>
    %c176 = arith.constant 176 : index
    %c0_7 = arith.constant 0 : index
    %6 = vector.load %arg1[%c176, %c0_7] : memref<192x128xf32, #tpu.memory_space<vmem>>, vector<8x32xf32>
    %c184 = arith.constant 184 : index
    %c0_8 = arith.constant 0 : index
    %7 = vector.load %arg1[%c184, %c0_8] : memref<192x128xf32, #tpu.memory_space<vmem>>, vector<2x16xf32>
    %cst = arith.constant dense<0.000000e+00> : vector<16x96xf32>
    %8 = tpu.matmul %0, %1, %cst {dimension_numbers = #tpu.dot_dimension_numbers<[1], [0], [0], [1], [0, 0, 1, 1], [], []>} : vector<16x96xf32>, vector<96x96xf32>, vector<16x96xf32> -> vector<16x96xf32>
    %9 = vector.broadcast %2 : vector<1x96xf32> to vector<16x96xf32>
    %10 = arith.addf %8, %9 : vector<16x96xf32>
    %11 = vector.extract_strided_slice %10 {offsets = [0, 0], sizes = [16, 32], strides = [1, 1]} : vector<16x96xf32> to vector<16x32xf32>
    %12 = vector.extract_strided_slice %10 {offsets = [0, 32], sizes = [16, 32], strides = [1, 1]} : vector<16x96xf32> to vector<16x32xf32>
    %13 = vector.extract_strided_slice %10 {offsets = [0, 64], sizes = [16, 32], strides = [1, 1]} : vector<16x96xf32> to vector<16x32xf32>
    %14 = arith.mulf %12, %11 : vector<16x32xf32>
    %cst_9 = arith.constant dense<0.000000e+00> : vector<16x8xf32>
    %15 = tpu.matmul %14, %5, %cst_9 {dimension_numbers = #tpu.dot_dimension_numbers<[1], [0], [0], [1], [0, 0, 1, 1], [], []>} : vector<16x32xf32>, vector<32x8xf32>, vector<16x8xf32> -> vector<16x8xf32>
    %16 = vector.extract_strided_slice %15 {offsets = [0, 0], sizes = [8, 8], strides = [1, 1]} : vector<16x8xf32> to vector<8x8xf32>
    %cst_10 = arith.constant dense<0xFF800000> : vector<8xf32>
    %17 = vector.multi_reduction <maximumf>, %16, %cst_10 [0] : vector<8x8xf32> to vector<8xf32>
    %18 = vector.shape_cast %17 : vector<8xf32> to vector<1x8xf32>
    %19 = vector.broadcast %18 : vector<1x8xf32> to vector<8x8xf32>
    %20 = arith.subf %16, %19 : vector<8x8xf32>
    %21 = math.exp %20 : vector<8x8xf32>
    %22 = vector.extract_strided_slice %15 {offsets = [8, 0], sizes = [8, 8], strides = [1, 1]} : vector<16x8xf32> to vector<8x8xf32>
    %cst_11 = arith.constant dense<0xFF800000> : vector<8xf32>
    %23 = vector.multi_reduction <maximumf>, %22, %cst_11 [0] : vector<8x8xf32> to vector<8xf32>
    %24 = vector.shape_cast %23 : vector<8xf32> to vector<1x8xf32>
    %25 = vector.broadcast %24 : vector<1x8xf32> to vector<8x8xf32>
    %26 = arith.subf %22, %25 : vector<8x8xf32>
    %27 = math.exp %26 : vector<8x8xf32>
    %28 = tpu.concatenate %21, %27 in 0 : vector<8x8xf32>, vector<8x8xf32> -> vector<16x8xf32>
    %cst_12 = arith.constant dense<0.000000e+00> : vector<16x32xf32>
    %29 = tpu.matmul %28, %6, %cst_12 {dimension_numbers = #tpu.dot_dimension_numbers<[1], [0], [0], [1], [0, 0, 1, 1], [], []>} : vector<16x8xf32>, vector<8x32xf32>, vector<16x32xf32> -> vector<16x32xf32>
    %30 = arith.mulf %29, %13 : vector<16x32xf32>
    %31 = tpu.concatenate %30, %29 in 1 : vector<16x32xf32>, vector<16x32xf32> -> vector<16x64xf32>
    %cst_13 = arith.constant dense<0.000000e+00> : vector<2x64xf32>
    %32 = tpu.matmul %7, %31, %cst_13 {dimension_numbers = #tpu.dot_dimension_numbers<[1], [0], [0], [1], [0, 0, 1, 1], [], []>} : vector<2x16xf32>, vector<16x64xf32>, vector<2x64xf32> -> vector<2x64xf32>
    %33 = vector.extract_strided_slice %32 {offsets = [0, 0], sizes = [2, 32], strides = [1, 1]} : vector<2x64xf32> to vector<2x32xf32>
    %34 = vector.extract_strided_slice %32 {offsets = [0, 32], sizes = [2, 32], strides = [1, 1]} : vector<2x64xf32> to vector<2x32xf32>
    %35 = tpu.reciprocal %34 {approx = true} : vector<2x32xf32> -> vector<2x32xf32>
    %36 = arith.mulf %34, %35 : vector<2x32xf32>
    %cst_14 = arith.constant 2.000000e+00 : f32
    %37 = vector.broadcast %cst_14 : f32 to vector<2x32xf32>
    %38 = arith.subf %37, %36 : vector<2x32xf32>
    %39 = arith.mulf %35, %38 : vector<2x32xf32>
    %40 = arith.mulf %33, %39 : vector<2x32xf32>
    %cst_15 = arith.constant dense<0.000000e+00> : vector<2x32xf32>
    %41 = tpu.matmul %40, %3, %cst_15 {dimension_numbers = #tpu.dot_dimension_numbers<[1], [0], [0], [1], [0, 0, 1, 1], [], []>} : vector<2x32xf32>, vector<32x32xf32>, vector<2x32xf32> -> vector<2x32xf32>
    %42 = vector.broadcast %4 : vector<1x32xf32> to vector<2x32xf32>
    %43 = arith.addf %41, %42 : vector<2x32xf32>
    %c0_16 = arith.constant 0 : index
    %c0_17 = arith.constant 0 : index
    %44 = vector.load %arg2[%c0_16, %c0_17] : memref<2x32xf32, #tpu.memory_space<vmem>>, vector<2x32xf32>
    tpu.vector_store %arg2[%c0_16, %c0_17], %43 {strides = array<i32>} : memref<2x32xf32, #tpu.memory_space<vmem>>, vector<2x32xf32>,
    return
  }
}

</mosaic_0001>

<llo_original>
// kernel: tpu_custom_call.1
$region0: #{tpu_custom_call.1}
  #allocation0 [shape = 'u32[]', space=smem, size = 0x4, offset = 0x4, fixed_abs, tag = 'smem constant byte address 0x4 - core index']
  #allocation1 [shape = 'u32[144,128]{1,0:T(1,128)}', space=vmem, size = 0x12000, scoped, tag = 'internal scratch']
  %s0 = inlined_call_operand.hbm [shape: f32[16,96], index: 0, kind: input, shape index: {}]
  %s1 = inlined_call_operand.hbm [shape: f32[192,128], index: 1, kind: input, shape index: {}]
  %s2 = inlined_call_operand.hbm [shape: f32[2,32], index: 2, kind: output, shape index: {}]
  %s3 = sld [smem:[#allocation0]]
  $region26: #{tpu_custom_call.1} parent=0
    _
  %s5 = ssub.s32 1, %s3
  %s6 = scalar_select 0, %s5, %s3
  $region1: #{tpu_custom_call.1} parent=0
    #allocation2 [shape = 'u8[8192]{0}', space=vmem, size = 0x2000, scoped, tag = 'input window, operand 0, single buffered']
    #allocation3 [shape = 's32[1]{0}', space=sflag, size = 0x4, scoped, tag = 'scoped memory for tpu_custom_call.1']
    #allocation4 [shape = 's32[1]{0}', space=sflag, size = 0x4, scoped, tag = 'scoped memory for tpu_custom_call.1']
    #allocation5 [shape = 'u8[98304]{0}', space=vmem, size = 0x18000, scoped, tag = 'input window, operand 1, single buffered']
    #allocation6 [shape = 's32[1]{0}', space=sflag, size = 0x4, scoped, tag = 'scoped memory for tpu_custom_call.1']
    #allocation7 [shape = 'u8[1024]{0}', space=vmem, size = 0x400, scoped, tag = 'output window, operand 0, single buffered']
    %7 = vsyncpa [#allocation3], 0
    %8 = vsyncpa [#allocation6], 0
    %9 = vsyncpa [#allocation4], 0
    // Predicated region
    $region2: #{tpu_custom_call.1} parent=1 // pred_check
      _
    $region3: #{tpu_custom_call.1} parent=1 // pred_check_branch
      %11 = sbr.rel (0) target = $region5
    $region4: #{tpu_custom_call.1} parent=1 // pred_region
      %s13 = ssub.s32 256, 256
      %14 = vsyncadd [#allocation3], %s13
      %s15 = sshll.u32 [#allocation2], 4
      %s16 = int_to_ptr.vmem [resolvable:$true] %s15
      %21 = dma.hbm_to_vmem [thread:$0]  %s0, 256, %s16, [#allocation3], 128, 128, 8
    $region5: #{tpu_custom_call.1} parent=1 // pred_fallthru
      _
    // Predicated region
    $region6: #{tpu_custom_call.1} parent=1 // pred_check
      _
    $region7: #{tpu_custom_call.1} parent=1 // pred_check_branch
      %23 = sbr.rel (0) target = $region9
    $region8: #{tpu_custom_call.1} parent=1 // pred_region
      %s25 = ssub.s32 3072, 3072
      %26 = vsyncadd [#allocation6], %s25
      %s27 = sshll.u32 [#allocation5], 4
      %s28 = int_to_ptr.vmem [resolvable:$true] %s27
      %33 = dma.hbm_to_vmem [thread:$0]  %s1, 3072, %s28, [#allocation6], 128, 128, 8
    $region9: #{tpu_custom_call.1} parent=1 // pred_fallthru
      _
    // Predicated region
    $region10: #{tpu_custom_call.1} parent=1 // pred_check
      _
    $region11: #{tpu_custom_call.1} parent=1 // pred_check_branch
      %35 = sbr.rel (0) target = $region13
    $region12: #{tpu_custom_call.1} parent=1 // pred_region
      %36 = dma.done [#allocation3], 256
    $region13: #{tpu_custom_call.1} parent=1 // pred_fallthru
      _
    // Predicated region
    $region14: #{tpu_custom_call.1} parent=1 // pred_check
      _
    $region15: #{tpu_custom_call.1} parent=1 // pred_check_branch
      %38 = sbr.rel (0) target = $region17
    $region16: #{tpu_custom_call.1} parent=1 // pred_region
      %39 = dma.done [#allocation6], 3072
    $region17: #{tpu_custom_call.1} parent=1 // pred_fallthru
      _
    %v40 = vld [vmem:[#allocation2] sm:$0xff]
    %v41 = vld [vmem:[#allocation2 + $0x8] sm:$0xff]
    %v42 = vld [vmem:[#allocation5] sm:$0xff]
    %v43 = vld [vmem:[#allocation5 + $0x8] sm:$0xff]
    %v44 = vld [vmem:[#allocation5 + $0x10] sm:$0xff]
    %v45 = vld [vmem:[#allocation5 + $0x18] sm:$0xff]
    %v46 = vld [vmem:[#allocation5 + $0x20] sm:$0xff]
    %v47 = vld [vmem:[#allocation5 + $0x28] sm:$0xff]
    %v48 = vld [vmem:[#allocation5 + $0x30] sm:$0xff]
    %v49 = vld [vmem:[#allocation5 + $0x38] sm:$0xff]
    %v50 = vld [vmem:[#allocation5 + $0x40] sm:$0xff]
    %v51 = vld [vmem:[#allocation5 + $0x48] sm:$0xff]
    %v52 = vld [vmem:[#allocation5 + $0x50] sm:$0xff]
    %v53 = vld [vmem:[#allocation5 + $0x58] sm:$0xff]
    %v54 = vld [vmem:[#allocation5 + $0x60] sm:$0x1]
    %v55 = vld [vmem:[#allocation5 + $0x68] sm:$0xff]
    %v56 = vld [vmem:[#allocation5 + $0x70] sm:$0xff]
    %v57 = vld [vmem:[#allocation5 + $0x78] sm:$0xff]
    %v58 = vld [vmem:[#allocation5 + $0x80] sm:$0xff]
    %v59 = vld [vmem:[#allocation5 + $0x88] sm:$0x1]
    %v60 = vld [vmem:[#allocation5 + $0x90] sm:$0xff]
    %v61 = vld [vmem:[#allocation5 + $0x98] sm:$0xff]
    %v62 = vld [vmem:[#allocation5 + $0xa0] sm:$0xff]
    %v63 = vld [vmem:[#allocation5 + $0xa8] sm:$0xff]
    %v64 = vld [vmem:[#allocation5 + $0xb0] sm:$0xff]
    %v65 = vld [vmem:[#allocation5 + $0xb8] sm:$0x3]
    %v66 = vlaneseq
    %v67 = vshrl.u32 %v66, 7
    %v68 = vsub.s32 0, %v67
    %v69 = vrot.slane %v54, %v68
    %vm70 = vcmask 785408
    %v72 = vsel %vm70, %v40, 0
    %v75 = vsel %vm70, %v41, 0
    %77 = vmatprep.subr.mxu0 0.0
    %78 = vmatpush1.msra.mxu0 0.0
    %79 = vmatprep.subr.mxu0 0.0
    %80 = vmatpush1.msra.mxu0 0.0
    %81 = vmatprep.subr.mxu0 0.0
    %82 = vmatpush1.msra.mxu0 0.0
    %83 = vmatprep.subr.mxu0 0.0
    %84 = vmatpush1.msra.mxu0 0.0
    %85 = vmatprep.subr.mxu0 0.0
    %86 = vmatpush1.msra.mxu0 %v53
    %87 = vmatprep.subr.mxu0 0.0
    %88 = vmatpush1.msra.mxu0 %v52
    %89 = vmatprep.subr.mxu0 0.0
    %90 = vmatpush1.msra.mxu0 %v51
    %91 = vmatprep.subr.mxu0 0.0
    %92 = vmatpush1.msra.mxu0 %v50
    %93 = vmatprep.subr.mxu0 0.0
    %94 = vmatpush1.msra.mxu0 %v49
    %95 = vmatprep.subr.mxu0 0.0
    %96 = vmatpush1.msra.mxu0 %v48
    %97 = vmatprep.subr.mxu0 0.0
    %98 = vmatpush1.msra.mxu0 %v47
    %99 = vmatprep.subr.mxu0 0.0
    %100 = vmatpush1.msra.mxu0 %v46
    %101 = vmatprep.subr.mxu0 0.0
    %102 = vmatpush1.msra.mxu0 %v45
    %103 = vmatprep.subr.mxu0 0.0
    %104 = vmatpush1.msra.mxu0 %v44
    %105 = vmatprep.subr.mxu0 0.0
    %106 = vmatpush1.msra.mxu0 %v43
    %107 = vmatprep.subr.mxu0 0.0
    %108 = vmatpush1.msra.mxu0 %v42
    %109 = vmatprep.subr.mxu0 0.0
    %110 = vmatpush2.msra.mxu0 0.0
    %111 = vmatprep.subr.mxu0 0.0
    %112 = vmatpush2.msra.mxu0 0.0
    %113 = vmatprep.subr.mxu0 0.0
    %114 = vmatpush2.msra.mxu0 0.0
    %115 = vmatprep.subr.mxu0 0.0
    %116 = vmatpush2.msra.mxu0 0.0
    %117 = vmatprep.subr.mxu0 0.0
    %118 = vmatpush2.msra.mxu0 0.0
    %119 = vmatprep.subr.mxu0 0.0
    %120 = vmatpush2.msra.mxu0 0.0
    %121 = vmatprep.subr.mxu0 0.0
    %122 = vmatpush2.msra.mxu0 0.0
    %123 = vmatprep.subr.mxu0 0.0
    %124 = vmatpush2.msra.mxu0 0.0
    %125 = vmatprep.subr.mxu0 0.0
    %126 = vmatpush2.msra.mxu0 0.0
    %127 = vmatprep.subr.mxu0 0.0
    %128 = vmatpush2.msra.mxu0 0.0
    %129 = vmatprep.subr.mxu0 0.0
    %130 = vmatpush2.msra.mxu0 0.0
    %131 = vmatprep.subr.mxu0 0.0
    %132 = vmatpush2.msra.mxu0 0.0
    %133 = vmatprep.subr.mxu0 0.0
    %134 = vmatpush2.msra.mxu0 0.0
    %135 = vmatprep.subr.mxu0 0.0
    %136 = vmatpush2.msra.mxu0 0.0
    %137 = vmatprep.subr.mxu0 0.0
    %138 = vmatpush2.msra.mxu0 0.0
    %139 = vmatprep.subr.mxu0 0.0
    %140 = vmatpush2.msra.mxu0 0.0
    %141 = vmatprep.mubr.f32.mxu0 0.0
    %142 = vmatmul.mubr.f32.gmra.mxu0 %v72
    %v143 = vpop.f32.mrf.mxu0
    %v144 = vadd.f32 %v69, %v143
    %v145 = vpop.f32.mrf.mxu0
    %146 = vmatprep.mubr.f32.mxu0 0.0
    %147 = vmatmul.mubr.f32.gmra.mxu0 %v75
    %v148 = vpop.f32.mrf.mxu0
    %v149 = vadd.f32 %v69, %v148
    %v150 = vpop.f32.mrf.mxu0
    %151 = vdwg.mxu0
    %154 = vrot.lane.b32.xlu0 %v144, 32
    %v155 = vpop.permute.xlu0 %154
    %156 = vrot.lane.b32.xlu0 %v149, 32
    %v157 = vpop.permute.xlu0 %156
    %v160 = vmul.f32 %v144, %v155
    %v161 = vmul.f32 %v149, %v157
    %164 = vrot.lane.b32.xlu0 %v160, 96
    %v165 = vpop.permute.xlu0 %164
    %166 = vrot.lane.b32.xlu0 %v161, 96
    %v167 = vpop.permute.xlu0 %166
    %vm168 = vcmask 261120
    %v169 = vsel %vm168, %v165, 0
    %v171 = vsel %vm168, %v167, 0
    %173 = vmatprep.subr.mxu0 0.0
    %174 = vmatpush1.msra.mxu0 0.0
    %175 = vmatprep.subr.mxu0 0.0
    %176 = vmatpush1.msra.mxu0 0.0
    %177 = vmatprep.subr.mxu0 0.0
    %178 = vmatpush1.msra.mxu0 0.0
    %179 = vmatprep.subr.mxu0 0.0
    %180 = vmatpush1.msra.mxu0 0.0
    %181 = vmatprep.subr.mxu0 0.0
    %182 = vmatpush1.msra.mxu0 0.0
    %183 = vmatprep.subr.mxu0 0.0
    %184 = vmatpush1.msra.mxu0 0.0
    %185 = vmatprep.subr.mxu0 0.0
    %186 = vmatpush1.msra.mxu0 0.0
    %187 = vmatprep.subr.mxu0 0.0
    %188 = vmatpush1.msra.mxu0 0.0
    %189 = vmatprep.subr.mxu0 0.0
    %190 = vmatpush1.msra.mxu0 0.0
    %191 = vmatprep.subr.mxu0 0.0
    %192 = vmatpush1.msra.mxu0 0.0
    %193 = vmatprep.subr.mxu0 0.0
    %194 = vmatpush1.msra.mxu0 0.0
    %195 = vmatprep.subr.mxu0 0.0
    %196 = vmatpush1.msra.mxu0 0.0
    %197 = vmatprep.subr.mxu0 0.0
    %198 = vmatpush1.msra.mxu0 %v63
    %199 = vmatprep.subr.mxu0 0.0
    %200 = vmatpush1.msra.mxu0 %v62
    %201 = vmatprep.subr.mxu0 0.0
    %202 = vmatpush1.msra.mxu0 %v61
    %203 = vmatprep.subr.mxu0 0.0
    %204 = vmatpush1.msra.mxu0 %v60
    %205 = vmatprep.subr.mxu0 0.0
    %206 = vmatpush2.msra.mxu0 0.0
    %207 = vmatprep.subr.mxu0 0.0
    %208 = vmatpush2.msra.mxu0 0.0
    %209 = vmatprep.subr.mxu0 0.0
    %210 = vmatpush2.msra.mxu0 0.0
    %211 = vmatprep.subr.mxu0 0.0
    %212 = vmatpush2.msra.mxu0 0.0
    %213 = vmatprep.subr.mxu0 0.0
    %214 = vmatpush2.msra.mxu0 0.0
    %215 = vmatprep.subr.mxu0 0.0
    %216 = vmatpush2.msra.mxu0 0.0
    %217 = vmatprep.subr.mxu0 0.0
    %218 = vmatpush2.msra.mxu0 0.0
    %219 = vmatprep.subr.mxu0 0.0
    %220 = vmatpush2.msra.mxu0 0.0
    %221 = vmatprep.subr.mxu0 0.0
    %222 = vmatpush2.msra.mxu0 0.0
    %223 = vmatprep.subr.mxu0 0.0
    %224 = vmatpush2.msra.mxu0 0.0
    %225 = vmatprep.subr.mxu0 0.0
    %226 = vmatpush2.msra.mxu0 0.0
    %227 = vmatprep.subr.mxu0 0.0
    %228 = vmatpush2.msra.mxu0 0.0
    %229 = vmatprep.subr.mxu0 0.0
    %230 = vmatpush2.msra.mxu0 0.0
    %231 = vmatprep.subr.mxu0 0.0
    %232 = vmatpush2.msra.mxu0 0.0
    %233 = vmatprep.subr.mxu0 0.0
    %234 = vmatpush2.msra.mxu0 0.0
    %235 = vmatprep.subr.mxu0 0.0
    %236 = vmatpush2.msra.mxu0 0.0
    %237 = vmatprep.mubr.f32.mxu0 0.0
    %238 = vmatmul.mubr.f32.gmra.mxu0 %v169
    %v239 = vpop.f32.mrf.mxu0
    %v240 = vadd.f32 0.0, %v239
    %v241 = vpop.f32.mrf.mxu0
    %242 = vmatprep.mubr.f32.mxu0 0.0
    %243 = vmatmul.mubr.f32.gmra.mxu0 %v171
    %v244 = vpop.f32.mrf.mxu0
    %v245 = vadd.f32 0.0, %v244
    %v246 = vpop.f32.mrf.mxu0
    %247 = vdwg.mxu0
    %vm248 = vcmask 64512
    %v249 = vsel %vm248, %v240, -inf
    %v250 = vrot.slane %v249, 4
    %v251 = vmax.f32 %v249, %v250
    %v252 = vrot.slane %v251, 2
    %v253 = vmax.f32 %v251, %v252
    %v254 = vrot.slane %v253, 1
    %v255 = vmax.f32 %v253, %v254
    %v256 = vsub.f32 %v240, %v255
    %v257 = vmul.f32 %v256, 1.442695
    %v258 = vpow.pop %v257
    %v259 = vsel %vm248, %v245, -inf
    %v260 = vrot.slane %v259, 4
    %v261 = vmax.f32 %v259, %v260
    %v262 = vrot.slane %v261, 2
    %v263 = vmax.f32 %v261, %v262
    %v264 = vrot.slane %v263, 1
    %v265 = vmax.f32 %v263, %v264
    %v266 = vsub.f32 %v245, %v265
    %v267 = vmul.f32 %v266, 1.442695
    %v268 = vpow.pop %v267
    %v270 = vsel %vm248, %v258, 0
    %v273 = vsel %vm248, %v268, 0
    %275 = vmatprep.subr.mxu0 0.0
    %276 = vmatpush1.msra.mxu0 0.0
    %277 = vmatprep.subr.mxu0 0.0
    %278 = vmatpush1.msra.mxu0 0.0
    %279 = vmatprep.subr.mxu0 0.0
    %280 = vmatpush1.msra.mxu0 0.0
    %281 = vmatprep.subr.mxu0 0.0
    %282 = vmatpush1.msra.mxu0 0.0
    %283 = vmatprep.subr.mxu0 0.0
    %284 = vmatpush1.msra.mxu0 0.0
    %285 = vmatprep.subr.mxu0 0.0
    %286 = vmatpush1.msra.mxu0 0.0
    %287 = vmatprep.subr.mxu0 0.0
    %288 = vmatpush1.msra.mxu0 0.0
    %289 = vmatprep.subr.mxu0 0.0
    %290 = vmatpush1.msra.mxu0 0.0
    %291 = vmatprep.subr.mxu0 0.0
    %292 = vmatpush1.msra.mxu0 0.0
    %293 = vmatprep.subr.mxu0 0.0
    %294 = vmatpush1.msra.mxu0 0.0
    %295 = vmatprep.subr.mxu0 0.0
    %296 = vmatpush1.msra.mxu0 0.0
    %297 = vmatprep.subr.mxu0 0.0
    %298 = vmatpush1.msra.mxu0 0.0
    %299 = vmatprep.subr.mxu0 0.0
    %300 = vmatpush1.msra.mxu0 0.0
    %301 = vmatprep.subr.mxu0 0.0
    %302 = vmatpush1.msra.mxu0 0.0
    %303 = vmatprep.subr.mxu0 0.0
    %304 = vmatpush1.msra.mxu0 0.0
    %305 = vmatprep.subr.mxu0 0.0
    %306 = vmatpush1.msra.mxu0 %v64
    %307 = vmatprep.subr.mxu0 0.0
    %308 = vmatpush2.msra.mxu0 0.0
    %309 = vmatprep.subr.mxu0 0.0
    %310 = vmatpush2.msra.mxu0 0.0
    %311 = vmatprep.subr.mxu0 0.0
    %312 = vmatpush2.msra.mxu0 0.0
    %313 = vmatprep.subr.mxu0 0.0
    %314 = vmatpush2.msra.mxu0 0.0
    %315 = vmatprep.subr.mxu0 0.0
    %316 = vmatpush2.msra.mxu0 0.0
    %317 = vmatprep.subr.mxu0 0.0
    %318 = vmatpush2.msra.mxu0 0.0
    %319 = vmatprep.subr.mxu0 0.0
    %320 = vmatpush2.msra.mxu0 0.0
    %321 = vmatprep.subr.mxu0 0.0
    %322 = vmatpush2.msra.mxu0 0.0
    %323 = vmatprep.subr.mxu0 0.0
    %324 = vmatpush2.msra.mxu0 0.0
    %325 = vmatprep.subr.mxu0 0.0
    %326 = vmatpush2.msra.mxu0 0.0
    %327 = vmatprep.subr.mxu0 0.0
    %328 = vmatpush2.msra.mxu0 0.0
    %329 = vmatprep.subr.mxu0 0.0
    %330 = vmatpush2.msra.mxu0 0.0
    %331 = vmatprep.subr.mxu0 0.0
    %332 = vmatpush2.msra.mxu0 0.0
    %333 = vmatprep.subr.mxu0 0.0
    %334 = vmatpush2.msra.mxu0 0.0
    %335 = vmatprep.subr.mxu0 0.0
    %336 = vmatpush2.msra.mxu0 0.0
    %337 = vmatprep.subr.mxu0 0.0
    %338 = vmatpush2.msra.mxu0 0.0
    %339 = vmatprep.mubr.f32.mxu0 0.0
    %340 = vmatmul.mubr.f32.gmra.mxu0 %v270
    %v341 = vpop.f32.mrf.mxu0
    %v342 = vadd.f32 0.0, %v341
    %v343 = vpop.f32.mrf.mxu0
    %344 = vmatprep.mubr.f32.mxu0 0.0
    %345 = vmatmul.mubr.f32.gmra.mxu0 %v273
    %v346 = vpop.f32.mrf.mxu0
    %v347 = vadd.f32 0.0, %v346
    %v348 = vpop.f32.mrf.mxu0
    %349 = vdwg.mxu0
    %350 = vrot.lane.b32.xlu0 %v144, 64
    %v351 = vpop.permute.xlu0 %350
    %352 = vrot.lane.b32.xlu0 %v149, 64
    %v353 = vpop.permute.xlu0 %352
    %v356 = vmul.f32 %v342, %v351
    %v357 = vmul.f32 %v347, %v353
    %360 = vrot.lane.b32.xlu0 %v342, 32
    %v361 = vpop.permute.xlu0 %360
    %362 = vrot.lane.b32.xlu0 %v347, 32
    %v363 = vpop.permute.xlu0 %362
    %v366 = vsel %vm168, %v356, %v361
    %v367 = vsel %vm168, %v357, %v363
    %vm368 = vcmask 130048
    %v370 = vsel %vm368, %v65, 0
    %372 = vmatprep.subr.mxu0 0.0
    %373 = vmatpush1.msra.mxu0 0.0
    %374 = vmatprep.subr.mxu0 0.0
    %375 = vmatpush1.msra.mxu0 0.0
    %376 = vmatprep.subr.mxu0 0.0
    %377 = vmatpush1.msra.mxu0 0.0
    %378 = vmatprep.subr.mxu0 0.0
    %379 = vmatpush1.msra.mxu0 0.0
    %380 = vmatprep.subr.mxu0 0.0
    %381 = vmatpush1.msra.mxu0 0.0
    %382 = vmatprep.subr.mxu0 0.0
    %383 = vmatpush1.msra.mxu0 0.0
    %384 = vmatprep.subr.mxu0 0.0
    %385 = vmatpush1.msra.mxu0 0.0
    %386 = vmatprep.subr.mxu0 0.0
    %387 = vmatpush1.msra.mxu0 0.0
    %388 = vmatprep.subr.mxu0 0.0
    %389 = vmatpush1.msra.mxu0 0.0
    %390 = vmatprep.subr.mxu0 0.0
    %391 = vmatpush1.msra.mxu0 0.0
    %392 = vmatprep.subr.mxu0 0.0
    %393 = vmatpush1.msra.mxu0 0.0
    %394 = vmatprep.subr.mxu0 0.0
    %395 = vmatpush1.msra.mxu0 0.0
    %396 = vmatprep.subr.mxu0 0.0
    %397 = vmatpush1.msra.mxu0 0.0
    %398 = vmatprep.subr.mxu0 0.0
    %399 = vmatpush1.msra.mxu0 0.0
    %400 = vmatprep.subr.mxu0 0.0
    %401 = vmatpush1.msra.mxu0 %v367
    %402 = vmatprep.subr.mxu0 0.0
    %403 = vmatpush1.msra.mxu0 %v366
    %404 = vmatprep.subr.mxu0 0.0
    %405 = vmatpush2.msra.mxu0 0.0
    %406 = vmatprep.subr.mxu0 0.0
    %407 = vmatpush2.msra.mxu0 0.0
    %408 = vmatprep.subr.mxu0 0.0
    %409 = vmatpush2.msra.mxu0 0.0
    %410 = vmatprep.subr.mxu0 0.0
    %411 = vmatpush2.msra.mxu0 0.0
    %412 = vmatprep.subr.mxu0 0.0
    %413 = vmatpush2.msra.mxu0 0.0
    %414 = vmatprep.subr.mxu0 0.0
    %415 = vmatpush2.msra.mxu0 0.0
    %416 = vmatprep.subr.mxu0 0.0
    %417 = vmatpush2.msra.mxu0 0.0
    %418 = vmatprep.subr.mxu0 0.0
    %419 = vmatpush2.msra.mxu0 0.0
    %420 = vmatprep.subr.mxu0 0.0
    %421 = vmatpush2.msra.mxu0 0.0
    %422 = vmatprep.subr.mxu0 0.0
    %423 = vmatpush2.msra.mxu0 0.0
    %424 = vmatprep.subr.mxu0 0.0
    %425 = vmatpush2.msra.mxu0 0.0
    %426 = vmatprep.subr.mxu0 0.0
    %427 = vmatpush2.msra.mxu0 0.0
    %428 = vmatprep.subr.mxu0 0.0
    %429 = vmatpush2.msra.mxu0 0.0
    %430 = vmatprep.subr.mxu0 0.0
    %431 = vmatpush2.msra.mxu0 0.0
    %432 = vmatprep.subr.mxu0 0.0
    %433 = vmatpush2.msra.mxu0 0.0
    %434 = vmatprep.subr.mxu0 0.0
    %435 = vmatpush2.msra.mxu0 0.0
    %436 = vmatprep.mubr.f32.mxu0 0.0
    %437 = vmatmul.mubr.f32.gmra.mxu0 %v370
    %v438 = vpop.f32.mrf.mxu0
    %v439 = vadd.f32 0.0, %v438
    %v440 = vpop.f32.mrf.mxu0
    %441 = vdwg.mxu0
    %v442 = vrcp.pop %v439
    %v443 = vmul.f32 %v439, %v442
    %v444 = vsub.f32 2.0, %v443
    %v445 = vmul.f32 %v442, %v444
    %447 = vrot.lane.b32.xlu0 %v445, 96
    %v448 = vpop.permute.xlu0 %447
    %v450 = vmul.f32 %v439, %v448
    %v451 = vlaneseq
    %v452 = vshrl.u32 %v451, 7
    %v453 = vsub.s32 0, %v452
    %v454 = vrot.slane %v59, %v453
    %v456 = vsel %vm168, %v450, 0
    %458 = vmatprep.subr.mxu0 0.0
    %459 = vmatpush1.msra.mxu0 0.0
    %460 = vmatprep.subr.mxu0 0.0
    %461 = vmatpush1.msra.mxu0 0.0
    %462 = vmatprep.subr.mxu0 0.0
    %463 = vmatpush1.msra.mxu0 0.0
    %464 = vmatprep.subr.mxu0 0.0
    %465 = vmatpush1.msra.mxu0 0.0
    %466 = vmatprep.subr.mxu0 0.0
    %467 = vmatpush1.msra.mxu0 0.0
    %468 = vmatprep.subr.mxu0 0.0
    %469 = vmatpush1.msra.mxu0 0.0
    %470 = vmatprep.subr.mxu0 0.0
    %471 = vmatpush1.msra.mxu0 0.0
    %472 = vmatprep.subr.mxu0 0.0
    %473 = vmatpush1.msra.mxu0 0.0
    %474 = vmatprep.subr.mxu0 0.0
    %475 = vmatpush1.msra.mxu0 0.0
    %476 = vmatprep.subr.mxu0 0.0
    %477 = vmatpush1.msra.mxu0 0.0
    %478 = vmatprep.subr.mxu0 0.0
    %479 = vmatpush1.msra.mxu0 0.0
    %480 = vmatprep.subr.mxu0 0.0
    %481 = vmatpush1.msra.mxu0 0.0
    %482 = vmatprep.subr.mxu0 0.0
    %483 = vmatpush1.msra.mxu0 %v58
    %484 = vmatprep.subr.mxu0 0.0
    %485 = vmatpush1.msra.mxu0 %v57
    %486 = vmatprep.subr.mxu0 0.0
    %487 = vmatpush1.msra.mxu0 %v56
    %488 = vmatprep.subr.mxu0 0.0
    %489 = vmatpush1.msra.mxu0 %v55
    %490 = vmatprep.subr.mxu0 0.0
    %491 = vmatpush2.msra.mxu0 0.0
    %492 = vmatprep.subr.mxu0 0.0
    %493 = vmatpush2.msra.mxu0 0.0
    %494 = vmatprep.subr.mxu0 0.0
    %495 = vmatpush2.msra.mxu0 0.0
    %496 = vmatprep.subr.mxu0 0.0
    %497 = vmatpush2.msra.mxu0 0.0
    %498 = vmatprep.subr.mxu0 0.0
    %499 = vmatpush2.msra.mxu0 0.0
    %500 = vmatprep.subr.mxu0 0.0
    %501 = vmatpush2.msra.mxu0 0.0
    %502 = vmatprep.subr.mxu0 0.0
    %503 = vmatpush2.msra.mxu0 0.0
    %504 = vmatprep.subr.mxu0 0.0
    %505 = vmatpush2.msra.mxu0 0.0
    %506 = vmatprep.subr.mxu0 0.0
    %507 = vmatpush2.msra.mxu0 0.0
    %508 = vmatprep.subr.mxu0 0.0
    %509 = vmatpush2.msra.mxu0 0.0
    %510 = vmatprep.subr.mxu0 0.0
    %511 = vmatpush2.msra.mxu0 0.0
    %512 = vmatprep.subr.mxu0 0.0
    %513 = vmatpush2.msra.mxu0 0.0
    %514 = vmatprep.subr.mxu0 0.0
    %515 = vmatpush2.msra.mxu0 0.0
    %516 = vmatprep.subr.mxu0 0.0
    %517 = vmatpush2.msra.mxu0 0.0
    %518 = vmatprep.subr.mxu0 0.0
    %519 = vmatpush2.msra.mxu0 0.0
    %520 = vmatprep.subr.mxu0 0.0
    %521 = vmatpush2.msra.mxu0 0.0
    %522 = vmatprep.mubr.f32.mxu0 0.0
    %523 = vmatmul.mubr.f32.gmra.mxu0 %v456
    %v524 = vpop.f32.mrf.mxu0
    %v525 = vadd.f32 %v454, %v524
    %v526 = vpop.f32.mrf.mxu0
    %527 = vdwg.mxu0
    %vm528 = vcmask 254976
    %529 = vst.msk [vmem:[#allocation7] sm:$0x3] %vm528, %v525
    // Predicated region
    $region18: #{tpu_custom_call.1} parent=1 // pred_check
      _
    $region19: #{tpu_custom_call.1} parent=1 // pred_check_branch
      %531 = sbr.rel (0) target = $region21
    $region20: #{tpu_custom_call.1} parent=1 // pred_region
      %s533 = ssub.s32 32, 32
      %534 = vsyncadd [#allocation4], %s533
      %s536 = sshll.u32 [#allocation7], 4
      %s537 = int_to_ptr.vmem [resolvable:$true] %s536
      %539 = dma.vmem_to_hbm [thread:$0]  %s537, 32, %s2, [#allocation4]
    $region21: #{tpu_custom_call.1} parent=1 // pred_fallthru
      _
    // Predicated region
    $region22: #{tpu_custom_call.1} parent=1 // pred_check
      _
    $region23: #{tpu_custom_call.1} parent=1 // pred_check_branch
      %541 = sbr.rel (0) target = $region25
    $region24: #{tpu_custom_call.1} parent=1 // pred_region
      %542 = dma.done [#allocation4], 32
    $region25: #{tpu_custom_call.1} parent=1 // pred_fallthru
      _
    %543 = vsyncpa [#allocation3], 1
    %544 = vsyncpa [#allocation6], 1
    %545 = vsyncpa [#allocation4], 1

</llo_original>
